<compile_context>
chip_gen: v6e
topology: v6e:2x2x1
jax: 0.10.0
libtpu: 0.0.40
codegen_flags: <defaults>
</compile_context>

<pallas_src>
import functools

import jax
import jax.numpy as jnp
from jax.experimental import pallas as pl
from jax.experimental.pallas import tpu as pltpu


def _gem_kernel(p_ref, x_ref, o_ref, acc_ref, *, eps, hw, tk, mask_spatial,
                p_static):
    # p_ref:   SMEM (1,) f32  -- GeM exponent (unused when p_static is set).
    # x_ref:   VMEM (TM, TK)  -- one row-tile x spatial-tile of the input.
    # o_ref:   VMEM (TM, 1)   -- pooled output per (n, c) row.
    # acc_ref: VMEM (TM, 1) f32 scratch -- partial sum over the spatial axis.
    k = pl.program_id(1)

    @pl.when(k == 0)
    def _():
        acc_ref[...] = jnp.zeros_like(acc_ref)

    x = x_ref[...].astype(jnp.float32)
    x = jnp.maximum(x, eps)                       # clamp(min=eps)

    if p_static is not None:
        # Compile-time small-integer exponent: repeated VPU multiplies instead
        # of exp/log, keeps the single EUP slot free (matters on v7x).
        xp = x
        for _ in range(int(p_static) - 1):
            xp = xp * x
    else:
        p = p_ref[0]
        xp = jnp.exp(p * jnp.log(x))              # x ** p (x >= eps > 0)

    if mask_spatial:
        # Zero out spatial padding columns so the sum is exact.
        col = jax.lax.broadcasted_iota(jnp.int32, xp.shape, 1) + k * tk
        xp = jnp.where(col < hw, xp, 0.0)

    acc_ref[...] += jnp.sum(xp, axis=-1, keepdims=True)

    @pl.when(k == pl.num_programs(1) - 1)
    def _():
        mean = acc_ref[...] * (1.0 / hw)          # avg over the real H*W
        if p_static is not None:
            inv_p = 1.0 / float(p_static)
        else:
            inv_p = 1.0 / p_ref[0]
        o_ref[...] = jnp.exp(jnp.log(mean) * inv_p).astype(o_ref.dtype)


def _round_up(a, b):
    return (a + b - 1) // b * b


def gem_pallas(x, p, eps=1e-6):
    """x: (N, C, H, W); p: scalar (runtime) or small Python int (static).

    Returns (N, C, 1, 1) in x's dtype, matching GeM.forward.
    """
    N, C, H, W = x.shape
    NC, HW = N * C, H * W
    itemsize = jnp.dtype(x.dtype).itemsize

    # Static integer-p fast path (VPU) only when p is a plain Python number.
    p_static = None
    if isinstance(p, (int, float)) and float(p) == int(p) and 1 <= int(p) <= 8:
        p_static = int(p)

    # --- spatial (lane) tiling -------------------------------------------
    MAX_TK = 4096                      # full-extent spatial block if it fits
    if HW <= MAX_TK:
        tk, hw_pad, mask_spatial = HW, HW, False
    else:
        tk = 2048                      # multiple of 128
        hw_pad, mask_spatial = _round_up(HW, tk), True

    # --- row (sublane) tiling: ~2 MiB per input buffer, multiple of 8 -----
    target_bytes = 2 * 1024 * 1024
    lane_bytes = max(tk, 128) * itemsize      # lanes pad to 128 regardless
    tm = max(8, (min(1024, target_bytes // lane_bytes) // 8) * 8)
    tm = min(tm, _round_up(NC, 8))
    nc_pad = _round_up(NC, tm)

    # Keep native dtype on the wire; upcast inside the kernel after the DMA.
    x2 = x.reshape(NC, HW)
    if nc_pad > NC or hw_pad > HW:
        # Pad rows/cols with a harmless positive value; padded rows are
        # discarded, padded cols are masked in-kernel.
        x2 = jnp.pad(x2, ((0, nc_pad - NC), (0, hw_pad - HW)),
                     constant_values=1.0)

    p_arr = jnp.reshape(jnp.asarray(p, dtype=jnp.float32), (1,))

    kernel = functools.partial(
        _gem_kernel, eps=float(eps), hw=HW, tk=tk,
        mask_spatial=mask_spatial, p_static=p_static)

    out = pl.pallas_call(
        kernel,
        out_shape=jax.ShapeDtypeStruct((nc_pad, 1), x.dtype),
        grid=(nc_pad // tm, hw_pad // tk),
        in_specs=[
            pl.BlockSpec(memory_space=pltpu.SMEM),            # p (scalar)
            pl.BlockSpec((tm, tk), lambda i, k: (i, k)),      # x tile
        ],
        out_specs=pl.BlockSpec((tm, 1), lambda i, k: (i, 0)),
        scratch_shapes=[pltpu.VMEM((tm, 1), jnp.float32)],
        compiler_params=pltpu.CompilerParams(
            dimension_semantics=("parallel", "arbitrary")),
    )(p_arr, x2)

    return out[:NC].reshape(N, C, 1, 1)


if __name__ == "__main__":
    key = jax.random.PRNGKey(0)
    N, C, H, W = 2, 4, 16, 16
    x = jax.random.normal(key, (N, C, H, W), dtype=jnp.float32)

    eps = 1e-6
    # Learnable-parameter path: p is a runtime scalar read from SMEM.
    p = jnp.float32(3.0)
    y = gem_pallas(x, p, eps)
    jax.block_until_ready(y)

    # Reference in plain JAX (same math as the F.avg_pool2d-based gem()).
    ref = jnp.mean(jnp.maximum(x, eps) ** 3.0, axis=(-2, -1),
                   keepdims=True) ** (1.0 / 3.0)
    assert y.shape == (N, C, 1, 1)
    assert jnp.allclose(y, ref, atol=1e-5, rtol=1e-5), (y, ref)

    # Static integer-p fast path (VPU x*x*x instead of exp/log).
    y_fast = gem_pallas(x, 3, eps)
    jax.block_until_ready(y_fast)
    assert jnp.allclose(y_fast, ref, atol=1e-5, rtol=1e-5), (y_fast, ref)

    print("KERNEL_OK")
</pallas_src>

<mosaic_0001>
module attributes {stable_mosaic.version = 11 : i64} {
  func.func @_gem_kernel(%arg0: i32, %arg1: i32, %arg2: memref<1xf32, #tpu.memory_space<smem>>, %arg3: memref<8x256xf32, #tpu.memory_space<vmem>>, %arg4: memref<8x1xf32, #tpu.memory_space<vmem>>, %arg5: memref<8x1xf32, #tpu.memory_space<vmem>>) attributes {dimension_semantics = [#tpu.dimension_semantics<parallel>, #tpu.dimension_semantics<arbitrary>], iteration_bounds = array<i64: 1, 1>, scalar_prefetch = 0 : i64, scratch_operands = 1 : i64, tpu.core_type = #tpu.core_type<tc>, window_params = [{transform_indices = @transform_0, window_bounds = array<i64: 1>}, {transform_indices = @transform_1, window_bounds = array<i64: 8, 256>}, {transform_indices = @transform_2, window_bounds = array<i64: 8, 1>}]} {
    %c0_i32 = arith.constant 0 : i32
    %0 = arith.cmpi eq, %arg1, %c0_i32 : i32
    %1 = arith.extui %0 : i1 to i32
    %c0_i32_0 = arith.constant 0 : i32
    %2 = arith.cmpi ne, %1, %c0_i32_0 : i32
    scf.if %2 {
      %cst_10 = arith.constant 0.000000e+00 : f32
      %19 = vector.broadcast %cst_10 : f32 to vector<8x1xf32>
      %c0_11 = arith.constant 0 : index
      %c0_12 = arith.constant 0 : index
      %20 = vector.load %arg5[%c0_11, %c0_12] : memref<8x1xf32, #tpu.memory_space<vmem>>, vector<8x1xf32>
      tpu.vector_store %arg5[%c0_11, %c0_12], %19 {strides = array<i32>} : memref<8x1xf32, #tpu.memory_space<vmem>>, vector<8x1xf32>,
    } else {
    }
    %c0 = arith.constant 0 : index
    %c0_1 = arith.constant 0 : index
    %3 = vector.load %arg3[%c0, %c0_1] : memref<8x256xf32, #tpu.memory_space<vmem>>, vector<8x256xf32>
    %cst = arith.constant 9.99999997E-7 : f32
    %4 = vector.broadcast %cst : f32 to vector<8x256xf32>
    %5 = arith.maximumf %3, %4 : vector<8x256xf32>
    %c0_2 = arith.constant 0 : index
    %6 = memref.load %arg2[%c0_2] : memref<1xf32, #tpu.memory_space<smem>>
    %7 = math.log %5 : vector<8x256xf32>
    %8 = vector.broadcast %6 : f32 to vector<8x256xf32>
    %9 = arith.mulf %8, %7 : vector<8x256xf32>
    %10 = math.exp %9 : vector<8x256xf32>
    %c0_3 = arith.constant 0 : index
    %c0_4 = arith.constant 0 : index
    %11 = vector.load %arg5[%c0_3, %c0_4] : memref<8x1xf32, #tpu.memory_space<vmem>>, vector<8x1xf32>
    %cst_5 = arith.constant dense<0.000000e+00> : vector<8xf32>
    %12 = vector.multi_reduction <add>, %10, %cst_5 [1] : vector<8x256xf32> to vector<8xf32>
    %13 = vector.shape_cast %12 : vector<8xf32> to vector<8x1xf32>
    %14 = arith.addf %11, %13 : vector<8x1xf32>
    %c0_6 = arith.constant 0 : index
    %c0_7 = arith.constant 0 : index
    %15 = vector.load %arg5[%c0_6, %c0_7] : memref<8x1xf32, #tpu.memory_space<vmem>>, vector<8x1xf32>
    tpu.vector_store %arg5[%c0_6, %c0_7], %14 {strides = array<i32>} : memref<8x1xf32, #tpu.memory_space<vmem>>, vector<8x1xf32>,
    %c0_i32_8 = arith.constant 0 : i32
    %16 = arith.cmpi eq, %arg1, %c0_i32_8 : i32
    %17 = arith.extui %16 : i1 to i32
    %c0_i32_9 = arith.constant 0 : i32
    %18 = arith.cmpi ne, %17, %c0_i32_9 : i32
    scf.if %18 {
      %c0_10 = arith.constant 0 : index
      %c0_11 = arith.constant 0 : index
      %19 = vector.load %arg5[%c0_10, %c0_11] : memref<8x1xf32, #tpu.memory_space<vmem>>, vector<8x1xf32>
      %cst_12 = arith.constant 3.906250e-03 : f32
      %20 = vector.broadcast %cst_12 : f32 to vector<8x1xf32>
      %21 = arith.mulf %19, %20 : vector<8x1xf32>
      %c0_13 = arith.constant 0 : index
      %22 = memref.load %arg2[%c0_13] : memref<1xf32, #tpu.memory_space<smem>>
      %cst_14 = arith.constant 1.000000e+00 : f32
      %23 = arith.divf %cst_14, %22 : f32
      %24 = math.log %21 : vector<8x1xf32>
      %25 = vector.broadcast %23 : f32 to vector<8x1xf32>
      %26 = arith.mulf %24, %25 : vector<8x1xf32>
      %27 = math.exp %26 : vector<8x1xf32>
      %c0_15 = arith.constant 0 : index
      %c0_16 = arith.constant 0 : index
      %28 = vector.load %arg4[%c0_15, %c0_16] : memref<8x1xf32, #tpu.memory_space<vmem>>, vector<8x1xf32>
      tpu.vector_store %arg4[%c0_15, %c0_16], %27 {strides = array<i32>} : memref<8x1xf32, #tpu.memory_space<vmem>>, vector<8x1xf32>,
    } else {
    }
    return
  }
  func.func @transform_0(%arg0: i32, %arg1: i32) -> i32 {
    %c0_i32 = arith.constant 0 : i32
    %c0_i32_0 = arith.constant 0 : i32
    return %c0_i32 : i32
  }
  func.func @transform_1(%arg0: i32, %arg1: i32) -> (i32, i32) {
    %c0_i32 = arith.constant 0 : i32
    return %arg0, %arg1 : i32, i32
  }
  func.func @transform_2(%arg0: i32, %arg1: i32) -> (i32, i32) {
    %c0_i32 = arith.constant 0 : i32
    %c0_i32_0 = arith.constant 0 : i32
    return %arg0, %c0_i32 : i32, i32
  }
}

</mosaic_0001>

<llo_original>
// kernel: tpu_custom_call.1
$region0: #{tpu_custom_call.1}
  #allocation0 [shape = 'u32[]', space=smem, size = 0x4, offset = 0x4, fixed_abs, tag = 'smem constant byte address 0x4 - core index']
  #allocation1 [shape = 'u32[144,128]{1,0:T(1,128)}', space=vmem, size = 0x12000, scoped, tag = 'internal scratch']
  #allocation2 [shape = 'f32[8,1]{1,0:T(8,128)}', space=vmem, size = 0x1000, scoped, tag = 'scratch operand']
  #allocation3 [shape = 'f32[1]{0:T(128)S(6)}', space=smem, size = 0x200, scoped, tag = 'scoped memory for tpu_custom_call.1']
  %s0 = inlined_call_operand.<no memory space> [shape: f32[1], index: 0, kind: input, shape index: {}]
  %s1 = inlined_call_operand.hbm [shape: f32[8,256], index: 1, kind: input, shape index: {}]
  %s2 = inlined_call_operand.vmem [shape: f32[8,1], index: 2, kind: output, shape index: {}]
  %s3 = sld [smem:[#allocation0]]
  $region30: #{tpu_custom_call.1} parent=0
    _
  %s5 = ssub.s32 1, %s3
  %s6 = scalar_select 0, %s5, %s3
  %7 = sst [smem:[#allocation3]] %s0
  $region1: #{tpu_custom_call.1} parent=0
    #allocation4 [shape = 'u8[8192]{0}', space=vmem, size = 0x2000, scoped, tag = 'input window, operand 1, single buffered']
    #allocation5 [shape = 's32[1]{0}', space=sflag, size = 0x4, scoped, tag = 'scoped memory for tpu_custom_call.1']
    %8 = vsyncpa [#allocation5], 0
    // Predicated region
    $region2: #{tpu_custom_call.1} parent=1 // pred_check
      _
    $region3: #{tpu_custom_call.1} parent=1 // pred_check_branch
      %10 = sbr.rel (0) target = $region5
    $region4: #{tpu_custom_call.1} parent=1 // pred_region
      _
    $region5: #{tpu_custom_call.1} parent=1 // pred_fallthru
      _
    // Predicated region
    $region6: #{tpu_custom_call.1} parent=1 // pred_check
      _
    $region7: #{tpu_custom_call.1} parent=1 // pred_check_branch
      %12 = sbr.rel (0) target = $region9
    $region8: #{tpu_custom_call.1} parent=1 // pred_region
      %s14 = ssub.s32 256, 256
      %15 = vsyncadd [#allocation5], %s14
      %s17 = sshll.u32 [#allocation4], 4
      %s18 = int_to_ptr.vmem [resolvable:$true] %s17
      %20 = dma.hbm_to_vmem [thread:$0]  %s1, 256, %s18, [#allocation5]
    $region9: #{tpu_custom_call.1} parent=1 // pred_fallthru
      _
    // Predicated region
    $region10: #{tpu_custom_call.1} parent=1 // pred_check
      _
    $region11: #{tpu_custom_call.1} parent=1 // pred_check_branch
      %22 = sbr.rel (0) target = $region13
    $region12: #{tpu_custom_call.1} parent=1 // pred_region
      %23 = dma.done [#allocation5], 256
    $region13: #{tpu_custom_call.1} parent=1 // pred_fallthru
      _
    %p24 = scmp.eq.s32.totalorder 0, 0
    // Predicated region
    $region14: #{tpu_custom_call.1} parent=1 // pred_check
      %p25 = pneg %p24
    $region15: #{tpu_custom_call.1} parent=1 // pred_check_branch
      %27 = sbr.rel (%p25) target = $region17
    $region16: #{tpu_custom_call.1} parent=1 // pred_region
      %vm28 = vcmask 7168
      %29 = vst.msk [vmem:[#allocation2] sm:$0xff] %vm28, 0.0
    $region17: #{tpu_custom_call.1} parent=1 // pred_fallthru
      _
    %v30 = vld [vmem:[#allocation4] sm:$0xff]
    %v31 = vld [vmem:[#allocation4 + $0x8] sm:$0xff]
    %v32 = vmax.f32 %v30, 1e-06
    %v33 = vmax.f32 %v31, 1e-06
    %s34 = sld [smem:[#allocation3]]
    %v35 = vlog2.pop %v32
    %v36 = vmul.f32 %v35, 0.6931472
    %v37 = vlog2.pop %v33
    %v38 = vmul.f32 %v37, 0.6931472
    %v39 = vstv %s34
    %v40 = vmul.f32 %v39, %v36
    %v41 = vmul.f32 %v39, %v38
    %v42 = vmul.f32 %v40, 1.442695
    %v43 = vpow.pop %v42
    %v44 = vmul.f32 %v41, 1.442695
    %v45 = vpow.pop %v44
    %v46 = vld [vmem:[#allocation2] sm:$0xff]
    %v47 = vadd.f32 %v43, %v45
    %48 = vadd.xlane.f32.xlu0 %v47
    %v49 = vpop.xlane.xlu0 %48
    %v50 = vadd.f32 %v46, %v49
    %vm51 = vcmask 7168
    %52 = vst.msk [vmem:[#allocation2] sm:$0xff] %vm51, %v50
    // Predicated region
    $region18: #{tpu_custom_call.1} parent=1 // pred_check
      %p53 = pneg %p24
    $region19: #{tpu_custom_call.1} parent=1 // pred_check_branch
      %55 = sbr.rel (%p53) target = $region21
    $region20: #{tpu_custom_call.1} parent=1 // pred_region
      %v56 = vld [vmem:[#allocation2] sm:$0xff]
      %v57 = vmul.f32 %v56, 0.00390625
      %s58 = sld [smem:[#allocation3]]
      %v59 = vstv %s58
      %v60 = vrcp.pop %v59
      %s61 = vtos %v60
      %v62 = vlog2.pop %v57
      %v63 = vmul.f32 %v62, 0.6931472
      %v64 = vstv %s61
      %v65 = vmul.f32 %v63, %v64
      %v66 = vmul.f32 %v65, 1.442695
      %v67 = vpow.pop %v66
      %68 = vst.msk [vmem:[%s2] sm:$0xff] %vm51, %v67
    $region21: #{tpu_custom_call.1} parent=1 // pred_fallthru
      _
    // Predicated region
    $region22: #{tpu_custom_call.1} parent=1 // pred_check
      _
    $region23: #{tpu_custom_call.1} parent=1 // pred_check_branch
      %70 = sbr.rel (0) target = $region25
    $region24: #{tpu_custom_call.1} parent=1 // pred_region
      _
    $region25: #{tpu_custom_call.1} parent=1 // pred_fallthru
      _
    // Predicated region
    $region26: #{tpu_custom_call.1} parent=1 // pred_check
      _
    $region27: #{tpu_custom_call.1} parent=1 // pred_check_branch
      %72 = sbr.rel (0) target = $region29
    $region28: #{tpu_custom_call.1} parent=1 // pred_region
      _
    $region29: #{tpu_custom_call.1} parent=1 // pred_fallthru
      _
    %73 = vsyncpa [#allocation5], 1

</llo_original>
